<compile_context>
chip_gen: v5e
topology: v5e:2x2
jax: 0.10.0
libtpu: 0.0.40
codegen_flags: <defaults>
</compile_context>

<pallas_src>
import jax
import jax.numpy as jnp
from jax.experimental import pallas as pl
from jax.experimental.pallas import tpu as pltpu


def _mse_kernel(pred_ref, truth_ref, out_ref):
    # Full tile resident in VMEM; elementwise diff/square on the VPU,
    # cross-lane/sublane reduce on the XLU, scalar result stored to SMEM.
    diff = pred_ref[...].astype(jnp.float32) - truth_ref[...].astype(jnp.float32)
    n = diff.shape[0] * diff.shape[1]
    out_ref[0] = jnp.sum(diff * diff) * (1.0 / n)


def mse_pallas(pred, truth_buf):
    """Mean squared error over the whole array, computed in a gridless Pallas call."""
    total = pred.shape[0] * pred.shape[1]
    if total % 128 == 0:
        # Single-vreg-column layout: (2, 256) -> (4, 128). Free in the wrapper.
        p = pred.reshape(total // 128, 128)
        t = truth_buf.reshape(total // 128, 128)
    else:
        p, t = pred, truth_buf

    out = pl.pallas_call(
        _mse_kernel,
        out_shape=jax.ShapeDtypeStruct((1,), jnp.float32),
        # No grid: whole arrays land in VMEM once, no pipeline/double-buffering.
        in_specs=[
            pl.BlockSpec(memory_space=pltpu.VMEM),
            pl.BlockSpec(memory_space=pltpu.VMEM),
        ],
        out_specs=pl.BlockSpec(memory_space=pltpu.SMEM),
    )(p, t)
    return out[0]


def _forward(pred, truth_buf):
    loss = mse_pallas(pred, truth_buf)
    # All six outputs are the identical MSE scalar (matches the reference).
    return (loss, loss, loss, loss, loss, loss)


_forward_jit = jax.jit(_forward)


class MyLossPallas:
    """JAX/Pallas equivalent of the PyTorch MyLoss module."""

    def __init__(self, key):
        # Deterministic stand-in for torch.rand(2, 256) in __init__.
        self.truth = jax.random.uniform(key, (2, 256), dtype=jnp.float32)

    def __call__(self, pred, truth):
        # NOTE: like the reference, the `truth` argument is ignored; the
        # stored buffer self.truth is used for every term.
        return _forward_jit(pred, self.truth)


if __name__ == "__main__":
    key = jax.random.PRNGKey(0)
    k_truth, k_pred, k_arg = jax.random.split(key, 3)

    module = MyLossPallas(k_truth)

    pred = jax.random.uniform(k_pred, (2, 256), dtype=jnp.float32)
    truth_arg = jax.random.uniform(k_arg, (2, 256), dtype=jnp.float32)  # ignored

    outs = module(pred, truth_arg)
    outs = jax.block_until_ready(outs)

    # Sanity check against plain-JAX reference.
    ref = jnp.mean((pred - module.truth) ** 2)
    for o in outs:
        assert jnp.allclose(o, ref, rtol=1e-6, atol=1e-6), (o, ref)

    print("KERNEL_OK")
</pallas_src>

<mosaic_0001>
module attributes {stable_mosaic.version = 11 : i64} {
  func.func @_mse_kernel(%arg0: memref<4x128xf32, #tpu.memory_space<vmem>>, %arg1: memref<4x128xf32, #tpu.memory_space<vmem>>, %arg2: memref<1xf32, #tpu.memory_space<smem>>) attributes {dimension_semantics = [], scalar_prefetch = 0 : i64, scratch_operands = 0 : i64, tpu.core_type = #tpu.core_type<tc>} {
    %c0 = arith.constant 0 : index
    %c0_0 = arith.constant 0 : index
    %0 = vector.load %arg0[%c0, %c0_0] : memref<4x128xf32, #tpu.memory_space<vmem>>, vector<4x128xf32>
    %c0_1 = arith.constant 0 : index
    %c0_2 = arith.constant 0 : index
    %1 = vector.load %arg1[%c0_1, %c0_2] : memref<4x128xf32, #tpu.memory_space<vmem>>, vector<4x128xf32>
    %2 = arith.subf %0, %1 : vector<4x128xf32>
    %3 = arith.mulf %2, %2 : vector<4x128xf32>
    %4 = vector.shape_cast %3 : vector<4x128xf32> to vector<1x4x128xf32>
    %cst = arith.constant dense<0.000000e+00> : vector<1xf32>
    %5 = vector.multi_reduction <add>, %4, %cst [1, 2] : vector<1x4x128xf32> to vector<1xf32>
    %6 = vector.shape_cast %5 : vector<1xf32> to vector<1x1x1xf32>
    %7 = vector.extract %6[0, 0, 0] : f32 from vector<1x1x1xf32>
    %cst_3 = arith.constant 0.001953125 : f32
    %8 = arith.mulf %7, %cst_3 : f32
    %c0_4 = arith.constant 0 : index
    %9 = memref.load %arg2[%c0_4] : memref<1xf32, #tpu.memory_space<smem>>
    memref.store %8, %arg2[%c0_4] : memref<1xf32, #tpu.memory_space<smem>>
    return
  }
}

</mosaic_0001>

<llo_original>
// kernel: _forward.1
$region0: #{_forward.1}
  #allocation0 [shape = 'u32[]', space=smem, size = 0x4, offset = 0x4, fixed_abs, tag = 'smem constant byte address 0x4 - core index']
  #allocation1 [shape = 'u32[72,128]{1,0:T(1,128)}', space=vmem, size = 0x9000, scoped, tag = 'internal scratch']
  %s0 = inlined_call_operand.vmem [shape: f32[4,128], index: 0, kind: input, shape index: {}]
  %s1 = inlined_call_operand.vmem [shape: f32[4,128], index: 1, kind: input, shape index: {}]
  %s2 = inlined_call_operand.hbm [shape: f32[1], index: 2, kind: output, shape index: {}]
  %s3 = sld [smem:[#allocation0]]
  $region18: #{_forward.1} parent=0
    _
  %s5 = ssub.s32 1, %s3
  %s6 = scalar_select 0, %s5, %s3
  $region1: #{_forward.1} parent=0
    #allocation2 [shape = 'u8[512]{0}', space=smem, size = 0x200, scoped, tag = 'output window, operand 0, single buffered']
    #allocation3 [shape = 's32[1]{0}', space=sflag, size = 0x4, scoped, tag = 'scoped memory for _forward.1']
    %7 = vsyncpa [#allocation3], 0
    // Predicated region
    $region2: #{_forward.1} parent=1 // pred_check
      _
    $region3: #{_forward.1} parent=1 // pred_check_branch
      %9 = sbr.rel (0) target = $region5
    $region4: #{_forward.1} parent=1 // pred_region
      _
    $region5: #{_forward.1} parent=1 // pred_fallthru
      _
    // Predicated region
    $region6: #{_forward.1} parent=1 // pred_check
      _
    $region7: #{_forward.1} parent=1 // pred_check_branch
      %11 = sbr.rel (0) target = $region9
    $region8: #{_forward.1} parent=1 // pred_region
      _
    $region9: #{_forward.1} parent=1 // pred_fallthru
      _
    %v12 = vld [vmem:[%s0] sm:$0xf]
    %v13 = vld [vmem:[%s1] sm:$0xf]
    %v14 = vsub.f32 %v12, %v13
    %v15 = vmul.f32 %v14, %v14
    %vm16 = vcmask 1043456
    %v17 = vsel %vm16, %v15, 0.0
    %18 = vadd.xlane.f32.xlu0 %v17
    %v19 = vpop.xlane.xlu0 %18
    %v20 = vrot.slane %v19, 4
    %v21 = vadd.f32 %v19, %v20
    %v22 = vrot.slane %v21, 2
    %v23 = vadd.f32 %v21, %v22
    %v24 = vrot.slane %v23, 1
    %v25 = vadd.f32 %v23, %v24
    %s26 = vtos %v25
    %s27 = smul.f32 %s26, 0.001953125
    %s28 = scalar_lea.smem [#allocation2], 0
    %29 = sst [smem:[%s28]] %s27
    // Predicated region
    $region10: #{_forward.1} parent=1 // pred_check
      _
    $region11: #{_forward.1} parent=1 // pred_check_branch
      %31 = sbr.rel (0) target = $region13
    $region12: #{_forward.1} parent=1 // pred_region
      %33 = vsyncadd [#allocation3], 0
      %s35 = sshll.u32 %s2, 4
      %s36 = int_to_ptr.hbm [resolvable:$true] %s35
      %38 = dma.smem_to_hbm [#allocation2], 16, %s36, [#allocation3]
    $region13: #{_forward.1} parent=1 // pred_fallthru
      _
    // Predicated region
    $region14: #{_forward.1} parent=1 // pred_check
      _
    $region15: #{_forward.1} parent=1 // pred_check_branch
      %40 = sbr.rel (0) target = $region17
    $region16: #{_forward.1} parent=1 // pred_region
      %42 = dma.done [#allocation3], 16
    $region17: #{_forward.1} parent=1 // pred_fallthru
      _
    %43 = sfence
    %44 = vsyncpa [#allocation3], 1

</llo_original>
